<compile_context>
chip_gen: v5e
topology: v5e:2x2
jax: 0.10.0
libtpu: 0.0.40
codegen_flags: <defaults>
</compile_context>

<pallas_src>
import functools
import math

import jax
import jax.numpy as jnp
from jax.experimental import pallas as pl
from jax.experimental.pallas import tpu as pltpu

_VMEM_LIMIT = 32 * 1024 * 1024        # scoped VMEM limit; safe on v5e/v6e/v7x
_TILE_BYTE_TARGET = 2 * 1024 * 1024   # ~2 MiB input per grid step (~4 MiB in+out)
_MAX_PACK = 8                         # cap on the lane-packing factor k


def _rup(n, m):
    return ((n + m - 1) // m) * m


def _pack_factor(C, L):
    """Smallest k with (k*C) % 128 == 0 -> lane-dense packed output, if usable."""
    k = 128 // math.gcd(C, 128)       # always a power of two (divides 128)
    if 1 < k <= _MAX_PACK and L % k == 0:
        return k
    return 1


def _pick_l_tile(L, C, itemsize, k, B):
    """Spatial tile: multiple of 128 dividing L, ~_TILE_BYTE_TARGET input bytes per
    grid step, while keeping >=4 (else >=2) independent parallel steps for v7x."""
    cands = sorted((t for t in range(128, L + 1, 128)
                    if L % t == 0 and t % k == 0), reverse=True)
    if not cands:
        return L                      # L % 128 != 0 -> single full-L block (lane rule)
    fitting = [t for t in cands if t * C * itemsize <= _TILE_BYTE_TARGET]
    if not fitting:
        fitting = [cands[-1]]         # huge C: even the smallest tile is over budget
    for min_steps in (4, 2):
        for t in fitting:             # descending: biggest tile that keeps parallelism
            if B * (L // t) >= min_steps:
                return t
    return fitting[0]


def _store_lane_packed(y_t, o_ref, yt_ref, k):
    """Store y_t (TL, C) into the lane-dense packed output block o_ref[0] = (TL//k, k*C).

    packed[r, j*C + c] == y_t[r*k + j, c].  Round-trip through a small VMEM scratch so
    the stride-k interleave becomes hardware-native sublane-strided loads plus static
    lane-range stores; the HBM-facing output buffer / DMA stay fully lane-dense.
    """
    if k == 1:
        o_ref[0] = y_t
        return
    C = y_t.shape[1]
    rows = y_t.shape[0] // k
    yt_ref[...] = y_t
    for j in range(k):                                        # k <= 8, unrolled
        o_ref[0, :, j * C:(j + 1) * C] = yt_ref[pl.ds(j, rows, stride=k), :]


def _transpose_kernel(x_ref, o_ref, *scratch, k):
    # x_ref: (1, C, TL) -> packed o_ref: (1, TL//k, k*C)
    y_t = x_ref[0].T.astype(o_ref.dtype)                      # (TL, C)
    _store_lane_packed(y_t, o_ref, scratch[0] if scratch else None, k)


def _norm_kernel(x_ref, w_ref, b_ref, o_ref, *scratch, eps, k):
    # x_ref: (1, C, TL)   w_ref/b_ref: (C, 1)   o_ref: (1, TL//k, k*C)
    x = x_ref[0].astype(jnp.float32)                          # (C, TL)
    # LayerNorm over channels computed BEFORE the transpose: reduction over the
    # sublane-stacked C axis (VPU adds), leaving the XLU free for the transpose.
    mean = jnp.mean(x, axis=0, keepdims=True)                 # (1, TL)
    var = jnp.mean((x - mean) ** 2, axis=0, keepdims=True)    # biased, like torch LN
    y = (x - mean) * jax.lax.rsqrt(var + eps)                 # f32 statistics
    y = y * w_ref[...] + b_ref[...]                           # (C, 1) lane-broadcast
    y_t = y.astype(o_ref.dtype).T                             # cast, then one transpose
    _store_lane_packed(y_t, o_ref, scratch[0] if scratch else None, k)


def _reference(x, norm_weight=None, norm_bias=None, eps=1e-5):
    B, C, H, W = x.shape
    y = jnp.transpose(x.reshape(B, C, H * W), (0, 2, 1))      # (B, L, C)
    if norm_weight is not None:
        mean = jnp.mean(y, axis=-1, keepdims=True)
        var = jnp.mean((y - mean) ** 2, axis=-1, keepdims=True)
        y = (y - mean) / jnp.sqrt(var + eps)
        y = y * norm_weight + norm_bias
    return y


def patch_embed_forward(x, norm_weight=None, norm_bias=None, eps: float = 1e-5):
    """PatchEmbed.forward: (B, C, H, W) -> (B, H*W, C); optional LayerNorm over C."""
    B, C, H, W = x.shape
    L = H * W
    x_flat = x.reshape(B, C, L)                               # metadata-only reshape
    itemsize = jnp.dtype(x.dtype).itemsize

    k = _pack_factor(C, L)
    TL = _pick_l_tile(L, C, itemsize, k, B)
    if TL % k != 0:                                           # safety; shouldn't trigger
        k = 1
    n_l = L // TL
    packed = k > 1

    # Rough per-step VMEM estimate (2x input + 2x output double buffers + scratch).
    in_buf = _rup(C, 8) * _rup(TL, 128) * itemsize
    out_buf = _rup(TL // k, 8) * _rup(k * C, 128) * itemsize
    scr_buf = _rup(TL, 8) * _rup(C, 128) * itemsize if packed else 0
    if 2 * in_buf + 2 * out_buf + scr_buf > _VMEM_LIMIT - (4 << 20):
        # Un-tileable shape (L % 128 != 0 and huge): don't risk a VMEM OOM; the op is
        # a pure layout change (+LN) so XLA handles it at roofline.
        return _reference(x, norm_weight, norm_bias, eps)

    out_shape = jax.ShapeDtypeStruct(
        (B, L // k, k * C) if packed else (B, L, C), x.dtype)
    x_spec = pl.BlockSpec((1, C, TL), lambda b, l: (b, 0, l))
    o_spec = (pl.BlockSpec((1, TL // k, k * C), lambda b, l: (b, l, 0)) if packed
              else pl.BlockSpec((1, TL, C), lambda b, l: (b, l, 0)))
    scratch_shapes = [pltpu.VMEM((TL, C), x.dtype)] if packed else []
    compiler_params = pltpu.CompilerParams(
        dimension_semantics=("parallel", "parallel"),         # independent tiles
        vmem_limit_bytes=_VMEM_LIMIT,
    )

    if norm_weight is None:
        # NOTE: a plain jnp.transpose is an equally good choice here (pure layout
        # change at HBM roofline); the Pallas path is kept because the lane-dense
        # packed store + byte-budgeted tiling remove the masked-store / small-step
        # penalties that previously made the XLA fallback preferable.
        out = pl.pallas_call(
            functools.partial(_transpose_kernel, k=k),
            out_shape=out_shape,
            grid=(B, n_l),
            in_specs=[x_spec],
            out_specs=o_spec,
            scratch_shapes=scratch_shapes,
            compiler_params=compiler_params,
        )(x_flat)
    else:
        w = norm_weight.reshape(C, 1).astype(jnp.float32)
        bia = norm_bias.reshape(C, 1).astype(jnp.float32)
        out = pl.pallas_call(
            functools.partial(_norm_kernel, eps=eps, k=k),
            out_shape=out_shape,
            grid=(B, n_l),
            in_specs=[
                x_spec,
                pl.BlockSpec((C, 1), lambda b, l: (0, 0)),
                pl.BlockSpec((C, 1), lambda b, l: (0, 0)),
            ],
            out_specs=o_spec,
            scratch_shapes=scratch_shapes,
            compiler_params=compiler_params,
        )(x_flat, w, bia)

    return out.reshape(B, L, C) if packed else out


if __name__ == "__main__":
    key = jax.random.PRNGKey(0)
    k1, k2, k3, k4 = jax.random.split(key, 4)

    # --- small shapes consistent with the module: B=2, embed_dim C=32, 8x8 patches ---
    B, C, H, W = 2, 32, 8, 8
    x = jax.random.normal(k1, (B, C, H, W), dtype=jnp.float32)

    # default construction (norm_layer=None)
    out = jax.block_until_ready(patch_embed_forward(x))
    assert out.shape == (B, H * W, C)
    assert jnp.allclose(out, _reference(x), atol=1e-6), "no-norm path mismatch"

    # norm_layer=nn.LayerNorm variant (non-trivial gamma/beta)
    gamma = jax.random.normal(k2, (C,), jnp.float32)
    beta = jax.random.normal(k3, (C,), jnp.float32)
    out_n = jax.block_until_ready(patch_embed_forward(x, gamma, beta))
    assert jnp.allclose(out_n, _reference(x, gamma, beta), atol=1e-5), \
        "layernorm path mismatch"

    # --- larger spatial extent to exercise byte-budgeted L-tiling (L=4096) ---
    B2, C2, H2, W2 = 2, 32, 64, 64
    x2 = jax.random.normal(k4, (B2, C2, H2, W2), dtype=jnp.float32)
    out2 = jax.block_until_ready(patch_embed_forward(x2, gamma, beta))
    assert out2.shape == (B2, H2 * W2, C2)
    assert jnp.allclose(out2, _reference(x2, gamma, beta), atol=1e-5), \
        "tiled layernorm path mismatch"
    out2t = jax.block_until_ready(patch_embed_forward(x2))
    assert jnp.allclose(out2t, _reference(x2), atol=1e-6), "tiled no-norm mismatch"

    print("KERNEL_OK")
</pallas_src>

<mosaic_0001>
module attributes {stable_mosaic.version = 11 : i64} {
  func.func @_transpose_kernel(%arg0: i32, %arg1: i32, %arg2: memref<1x32x64xf32, #tpu.memory_space<vmem>>, %arg3: memref<1x16x128xf32, #tpu.memory_space<vmem>>, %arg4: memref<64x32xf32, #tpu.memory_space<vmem>>) attributes {dimension_semantics = [#tpu.dimension_semantics<parallel>, #tpu.dimension_semantics<parallel>], iteration_bounds = array<i64: 2, 1>, scalar_prefetch = 0 : i64, scratch_operands = 1 : i64, tpu.core_type = #tpu.core_type<tc>, window_params = [{transform_indices = @transform_0, window_bounds = array<i64: 1, 32, 64>}, {transform_indices = @transform_1, window_bounds = array<i64: 1, 16, 128>}]} {
    %c0 = arith.constant 0 : index
    %c0_0 = arith.constant 0 : index
    %c0_1 = arith.constant 0 : index
    %0 = vector.load %arg2[%c0, %c0_0, %c0_1] : memref<1x32x64xf32, #tpu.memory_space<vmem>>, vector<1x32x64xf32>
    %1 = vector.shape_cast %0 : vector<1x32x64xf32> to vector<32x64xf32>
    %2 = tpu.transpose %1, [1, 0] : vector<32x64xf32> -> vector<64x32xf32>
    %c0_2 = arith.constant 0 : index
    %c0_3 = arith.constant 0 : index
    %3 = vector.load %arg4[%c0_2, %c0_3] : memref<64x32xf32, #tpu.memory_space<vmem>>, vector<64x32xf32>
    tpu.vector_store %arg4[%c0_2, %c0_3], %2 {strides = array<i32>} : memref<64x32xf32, #tpu.memory_space<vmem>>, vector<64x32xf32>,
    %c0_4 = arith.constant 0 : index
    %c0_5 = arith.constant 0 : index
    %4 = tpu.strided_load %arg4[%c0_4, %c0_5] {strides = array<i32: 4, 1>} : memref<64x32xf32, #tpu.memory_space<vmem>>, vector<16x32xf32>
    %c0_6 = arith.constant 0 : index
    %c0_7 = arith.constant 0 : index
    %c0_8 = arith.constant 0 : index
    %5 = vector.load %arg3[%c0_6, %c0_7, %c0_8] : memref<1x16x128xf32, #tpu.memory_space<vmem>>, vector<1x16x32xf32>
    %6 = vector.shape_cast %5 : vector<1x16x32xf32> to vector<16x32xf32>
    %7 = vector.shape_cast %4 : vector<16x32xf32> to vector<1x16x32xf32>
    tpu.vector_store %arg3[%c0_6, %c0_7, %c0_8], %7 {strides = array<i32>} : memref<1x16x128xf32, #tpu.memory_space<vmem>>, vector<1x16x32xf32>,
    %c1 = arith.constant 1 : index
    %c0_9 = arith.constant 0 : index
    %8 = tpu.strided_load %arg4[%c1, %c0_9] {strides = array<i32: 4, 1>} : memref<64x32xf32, #tpu.memory_space<vmem>>, vector<16x32xf32>
    %c0_10 = arith.constant 0 : index
    %c0_11 = arith.constant 0 : index
    %c32 = arith.constant 32 : index
    %9 = vector.load %arg3[%c0_10, %c0_11, %c32] : memref<1x16x128xf32, #tpu.memory_space<vmem>>, vector<1x16x32xf32>
    %10 = vector.shape_cast %9 : vector<1x16x32xf32> to vector<16x32xf32>
    %11 = vector.shape_cast %8 : vector<16x32xf32> to vector<1x16x32xf32>
    tpu.vector_store %arg3[%c0_10, %c0_11, %c32], %11 {strides = array<i32>} : memref<1x16x128xf32, #tpu.memory_space<vmem>>, vector<1x16x32xf32>,
    %c2 = arith.constant 2 : index
    %c0_12 = arith.constant 0 : index
    %12 = tpu.strided_load %arg4[%c2, %c0_12] {strides = array<i32: 4, 1>} : memref<64x32xf32, #tpu.memory_space<vmem>>, vector<16x32xf32>
    %c0_13 = arith.constant 0 : index
    %c0_14 = arith.constant 0 : index
    %c64 = arith.constant 64 : index
    %13 = vector.load %arg3[%c0_13, %c0_14, %c64] : memref<1x16x128xf32, #tpu.memory_space<vmem>>, vector<1x16x32xf32>
    %14 = vector.shape_cast %13 : vector<1x16x32xf32> to vector<16x32xf32>
    %15 = vector.shape_cast %12 : vector<16x32xf32> to vector<1x16x32xf32>
    tpu.vector_store %arg3[%c0_13, %c0_14, %c64], %15 {strides = array<i32>} : memref<1x16x128xf32, #tpu.memory_space<vmem>>, vector<1x16x32xf32>,
    %c3 = arith.constant 3 : index
    %c0_15 = arith.constant 0 : index
    %16 = tpu.strided_load %arg4[%c3, %c0_15] {strides = array<i32: 4, 1>} : memref<64x32xf32, #tpu.memory_space<vmem>>, vector<16x32xf32>
    %c0_16 = arith.constant 0 : index
    %c0_17 = arith.constant 0 : index
    %c96 = arith.constant 96 : index
    %17 = vector.load %arg3[%c0_16, %c0_17, %c96] : memref<1x16x128xf32, #tpu.memory_space<vmem>>, vector<1x16x32xf32>
    %18 = vector.shape_cast %17 : vector<1x16x32xf32> to vector<16x32xf32>
    %19 = vector.shape_cast %16 : vector<16x32xf32> to vector<1x16x32xf32>
    tpu.vector_store %arg3[%c0_16, %c0_17, %c96], %19 {strides = array<i32>} : memref<1x16x128xf32, #tpu.memory_space<vmem>>, vector<1x16x32xf32>,
    return
  }
  func.func @transform_0(%arg0: i32, %arg1: i32) -> (i32, i32, i32) {
    %c0_i32 = arith.constant 0 : i32
    %c0_i32_0 = arith.constant 0 : i32
    return %arg0, %c0_i32, %arg1 : i32, i32, i32
  }
  func.func @transform_1(%arg0: i32, %arg1: i32) -> (i32, i32, i32) {
    %c0_i32 = arith.constant 0 : i32
    %c0_i32_0 = arith.constant 0 : i32
    return %arg0, %arg1, %c0_i32 : i32, i32, i32
  }
}

</mosaic_0001>

<llo_original>
// kernel: tpu_custom_call.1
$region0: #{tpu_custom_call.1}
  #allocation0 [shape = 'u32[]', space=smem, size = 0x4, offset = 0x4, fixed_abs, tag = 'smem constant byte address 0x4 - core index']
  #allocation1 [shape = 'u32[72,128]{1,0:T(1,128)}', space=vmem, size = 0x9000, scoped, tag = 'internal scratch']
  #allocation2 [shape = 'f32[64,32]{1,0:T(8,128)}', space=vmem, size = 0x8000, scoped, tag = 'scratch operand']
  %s0 = inlined_call_operand.hbm [shape: f32[2,32,64], index: 0, kind: input, shape index: {}]
  %s1 = inlined_call_operand.hbm [shape: f32[2,16,128], index: 1, kind: output, shape index: {}]
  %s2 = sld [smem:[#allocation0]]
  $region41: #{tpu_custom_call.1} parent=0
    _
  %s4 = ssub.s32 1, %s2
  %s5 = scalar_select 0, %s4, %s2
  $region1: #{tpu_custom_call.1} parent=0
    #allocation3 [shape = 'u8[32768]{0}', space=vmem, size = 0x8000, scoped, tag = 'input window, operand 0']
    #allocation4 [shape = 's32[2]{0}', space=sflag, size = 0x8, scoped, tag = 'scoped memory for tpu_custom_call.1']
    #allocation5 [shape = 's32[2]{0}', space=sflag, size = 0x8, scoped, tag = 'scoped memory for tpu_custom_call.1']
    #allocation6 [shape = 'u8[16384]{0}', space=vmem, size = 0x4000, scoped, tag = 'output window, operand 0']
    %6 = vsyncpa [#allocation4], 0
    %s7 = scalar_lea.sflag [#allocation4], 1
    %8 = vsyncpa %s7, 0
    %9 = vsyncpa [#allocation5], 0
    %s10 = scalar_lea.sflag [#allocation5], 1
    %11 = vsyncpa %s10, 0
    loop: start=0, step=1, limit=4
    $region2: #{tpu_custom_call.1} parent=1 // loop_pre_header
      _
    $region3: #{tpu_custom_call.1} parent=1 // loop_header
      %s13 = sphi 0, %s17
      %p14 = scmp.ge.s32.totalorder %s13, 4
      %s20 = sphi 0, %s32
      %s21 = sphi 0, %s28
      %s22 = sphi 0, %s20
      %s23 = sphi 0, %s21
      %s24 = sphi 0, %s22
      %s25 = sphi 0, %s23
      %s37 = sphi 0, %s39
      %s40 = sphi 0, %s37
      %s41 = sphi 0, %s40
      %s57 = sphi 0, %s41
      %s65 = sphi 0, %s67
      %s68 = sphi 0, %s65
      %s69 = sphi 0, %s68
      %s85 = sphi 0, %s69
    $region4: #{tpu_custom_call.1} parent=1 // loop_header_branch
      %16 = sbr.rel (%p14) target = $region8
    $region5: #{tpu_custom_call.1} parent=1 // loop_body
      %s18 = ssub.s32 %s13, 1
      %s19 = ssub.s32 %s13, 2
      %s26 = sadd.s32 1, %s21
      %p27 = scmp.ge.s32.totalorder %s26, 1
      %s28 = scalar_select %p27, 0, %s26
      %s29 = sadd.s32 1, %s20
      %s30 = scalar_select %p27, %s29, %s20
      %p31 = scmp.ge.s32.totalorder %s30, 2
      %s32 = scalar_select %p31, 0, %s30
      %s33 = ssub.s32 %s20, %s32
      %s34 = ssub.s32 %s21, %s28
      %s35 = sor.u32 %s33, %s34
      %p36 = scmp.eq.s32.totalorder %s35, 0
      %s38 = sadd.s32 %s37, 1
      %s39 = scalar_select %p36, %s37, %s38
      %p42 = pneg %p36
      %p43 = scmp.eq.s32.totalorder %s13, 1
      %p44 = por %p42, %p43
      %p45 = scmp.ne.s32.totalorder %s37, %s40
      %p46 = scmp.eq.s32.totalorder %s13, 0
      %p47 = por %p45, %p46
      %p48 = scmp.ne.s32.totalorder %s37, %s40
      %p49 = scmp.eq.s32.totalorder %s18, 1
      %p50 = por %p48, %p49
      %p51 = scmp.ne.s32.totalorder %s40, %s41
      %p52 = scmp.eq.s32.totalorder %s18, 0
      %p53 = por %p51, %p52
      %p54 = scmp.ne.s32.totalorder %s40, %s41
      %p55 = scmp.eq.s32.totalorder %s19, 1
      %p56 = por %p54, %p55
      %p58 = scmp.ne.s32.totalorder %s41, %s57
      %p59 = scmp.eq.s32.totalorder %s19, 0
      %p60 = por %p58, %p59
      %s61 = ssub.s32 %s20, %s32
      %s62 = ssub.s32 %s21, %s28
      %s63 = sor.u32 %s61, %s62
      %p64 = scmp.eq.s32.totalorder %s63, 0
      %s66 = sadd.s32 %s65, 1
      %s67 = scalar_select %p64, %s65, %s66
      %p70 = pneg %p64
      %p71 = scmp.eq.s32.totalorder %s13, 1
      %p72 = por %p70, %p71
      %p73 = scmp.ne.s32.totalorder %s65, %s68
      %p74 = scmp.eq.s32.totalorder %s13, 0
      %p75 = por %p73, %p74
      %p76 = scmp.ne.s32.totalorder %s65, %s68
      %p77 = scmp.eq.s32.totalorder %s18, 1
      %p78 = por %p76, %p77
      %p79 = scmp.ne.s32.totalorder %s68, %s69
      %p80 = scmp.eq.s32.totalorder %s18, 0
      %p81 = por %p79, %p80
      %p82 = scmp.ne.s32.totalorder %s68, %s69
      %p83 = scmp.eq.s32.totalorder %s19, 1
      %p84 = por %p82, %p83
      %p86 = scmp.ne.s32.totalorder %s69, %s85
      %p87 = scmp.eq.s32.totalorder %s19, 0
      %p88 = por %p86, %p87
      %p89 = scmp.le.s32.totalorder 1, %s13
      %p90 = scmp.lt.s32.totalorder %s13, 3
      %p91 = pnand %p89, %p90
      %p92 = pneg %p91
      // Predicated region
      $region9: #{tpu_custom_call.1} parent=5 // pred_check
        _
      $region10: #{tpu_custom_call.1} parent=5 // pred_check_branch
        %94 = sbr.rel (%p91) target = $region12
      $region11: #{tpu_custom_call.1} parent=5 // pred_region
        %s95 = ssub.s32 %s13, 1
      $region12: #{tpu_custom_call.1} parent=5 // pred_fallthru
        _
      %p96 = scmp.lt.s32.totalorder %s13, 2
      // Predicated region
      $region13: #{tpu_custom_call.1} parent=5 // pred_check
        %p97 = pneg %p96
      $region14: #{tpu_custom_call.1} parent=5 // pred_check_branch
        %99 = sbr.rel (%p97) target = $region16
      $region15: #{tpu_custom_call.1} parent=5 // pred_region
        // Predicated region
        $region17: #{tpu_custom_call.1} parent=15 // pred_check
          %p100 = pneg %p47
        $region18: #{tpu_custom_call.1} parent=15 // pred_check_branch
          %102 = sbr.rel (%p100) target = $region20
        $region19: #{tpu_custom_call.1} parent=15 // pred_region
          %s103 = sand.u32 %s37, 1
          %s104 = scalar_lea.sflag [#allocation4], %s103
          %s105 = sand.u32 %s37, 1
          %s106 = smul.addr %s105, 32
          %s107 = scalar_lea.vmem [#allocation3], %s106
          %109 = vsyncadd %s104, 0
          %s110 = smul.addr %s20, 4
          %s111 = sadd.s32 %s21, %s110
          %s112 = smul.addr %s111, 8
          %s113 = scalar_lea.hbm %s0, %s112
          %s114 = sshll.u32 %s113, 4
          %s115 = int_to_ptr.hbm [resolvable:$true] %s114
          %s116 = sshll.u32 %s107, 4
          %s117 = int_to_ptr.vmem [resolvable:$true] %s116
          %122 = dma.hbm_to_vmem [thread:$0]  %s115, 512, %s117, %s104, 128, 128, 8
        $region20: #{tpu_custom_call.1} parent=15 // pred_fallthru
          _
      $region16: #{tpu_custom_call.1} parent=5 // pred_fallthru
        _
      %p123 = scmp.le.s32.totalorder 1, %s13
      %p124 = scmp.lt.s32.totalorder %s13, 3
      %p125 = pnand %p123, %p124
      %p126 = pneg %p125
      // Predicated region
      $region21: #{tpu_custom_call.1} parent=5 // pred_check
        _
      $region22: #{tpu_custom_call.1} parent=5 // pred_check_branch
        %128 = sbr.rel (%p125) target = $region24
      $region23: #{tpu_custom_call.1} parent=5 // pred_region
        %s129 = ssub.s32 %s13, 1
        %s130 = sand.u32 %s40, 1
        %s131 = scalar_lea.sflag [#allocation4], %s130
        %s132 = sand.u32 %s40, 1
        %s133 = smul.addr %s132, 32
        %s134 = scalar_lea.vmem [#allocation3], %s133
        // Predicated region
        $region25: #{tpu_custom_call.1} parent=23 // pred_check
          %p135 = pneg %p53
        $region26: #{tpu_custom_call.1} parent=23 // pred_check_branch
          %137 = sbr.rel (%p135) target = $region28
        $region27: #{tpu_custom_call.1} parent=23 // pred_region
          %139 = dma.done %s131, 512
        $region28: #{tpu_custom_call.1} parent=23 // pred_fallthru
          _
        %s140 = sand.u32 %s40, 1
        %s141 = scalar_lea.sflag [#allocation4], %s140
        %s142 = sand.u32 %s40, 1
        %s143 = smul.addr %s142, 32
        %s144 = scalar_lea.vmem [#allocation3], %s143
        %p145 = pneg %p53
        %p146 = pneg %p50
        %p147 = pneg %p81
        %p148 = pneg %p78
        %s149 = sand.u32 %s68, 1
        %s150 = scalar_lea.sflag [#allocation5], %s149
        %s151 = sand.u32 %s68, 1
        %s152 = smul.addr %s151, 16
        %s153 = scalar_lea.vmem [#allocation6], %s152
        %s154 = smul.u32 2, %s23
        %v155 = vld [vmem:[%s134] sm:$0xff]
        %v156 = vld [vmem:[%s134 + $0x8] sm:$0xff]
        %v157 = vld [vmem:[%s134 + $0x10] sm:$0xff]
        %v158 = vld [vmem:[%s134 + $0x18] sm:$0xff]
        %159 = vxpose.xlu0.b32.start [1/16] %v155, 128
        %160 = vxpose.xlu0.b32.cont [2/16] %v156, 128
        %161 = vxpose.xlu0.b32.cont [3/16] %v157, 128
        %162 = vxpose.xlu0.b32.cont [4/16] %v158, 128
        %163 = vxpose.xlu0.b32.cont [5/16] 0.0, 128
        %164 = vxpose.xlu0.b32.cont [6/16] 0.0, 128
        %165 = vxpose.xlu0.b32.cont [7/16] 0.0, 128
        %166 = vxpose.xlu0.b32.cont [8/16] 0.0, 128
        %167 = vxpose.xlu0.b32.cont [9/16] 0.0, 128
        %168 = vxpose.xlu0.b32.cont [10/16] 0.0, 128
        %169 = vxpose.xlu0.b32.cont [11/16] 0.0, 128
        %170 = vxpose.xlu0.b32.cont [12/16] 0.0, 128
        %171 = vxpose.xlu0.b32.cont [13/16] 0.0, 128
        %172 = vxpose.xlu0.b32.cont [14/16] 0.0, 128
        %173 = vxpose.xlu0.b32.cont [15/16] 0.0, 128
        %174 = vxpose.xlu0.b32.end [16/16] 0.0, 128
        %v175 = vpop.trf.xlu0
        %v176 = vpop.trf.xlu0
        %v177 = vpop.trf.xlu0
        %v178 = vpop.trf.xlu0
        %v179 = vpop.trf.xlu0
        %v180 = vpop.trf.xlu0
        %v181 = vpop.trf.xlu0
        %v182 = vpop.trf.xlu0
        %v183 = vpop.trf.xlu0
        %v184 = vpop.trf.xlu0
        %v185 = vpop.trf.xlu0
        %v186 = vpop.trf.xlu0
        %v187 = vpop.trf.xlu0
        %v188 = vpop.trf.xlu0
        %v189 = vpop.trf.xlu0
        %v190 = vpop.trf.xlu0
        %vm191 = vcmask 261120
        %192 = vst.msk [vmem:[#allocation2] sm:$0xff] %vm191, %v175
        %193 = vst.msk [vmem:[#allocation2 + $0x8] sm:$0xff] %vm191, %v176
        %194 = vst.msk [vmem:[#allocation2 + $0x10] sm:$0xff] %vm191, %v177
        %195 = vst.msk [vmem:[#allocation2 + $0x18] sm:$0xff] %vm191, %v178
        %196 = vst.msk [vmem:[#allocation2 + $0x20] sm:$0xff] %vm191, %v179
        %197 = vst.msk [vmem:[#allocation2 + $0x28] sm:$0xff] %vm191, %v180
        %198 = vst.msk [vmem:[#allocation2 + $0x30] sm:$0xff] %vm191, %v181
        %199 = vst.msk [vmem:[#allocation2 + $0x38] sm:$0xff] %vm191, %v182
        %v200 = vld [vmem:[#allocation2] ss:$4 sm:$0xff]
        %s201 = scalar_lea.vmem [#allocation2], 32
        %v202 = vld [vmem:[%s201] ss:$4 sm:$0xff]
        %203 = vst.msk [vmem:[%s153] sm:$0xff] %vm191, %v200
        %204 = vst.msk [vmem:[%s153 + $0x8] sm:$0xff] %vm191, %v202
        %s205 = scalar_lea.vmem [#allocation2], 1
        %v206 = vld [vmem:[%s205] ss:$4 sm:$0xff]
        %s207 = scalar_lea.vmem [#allocation2], 33
        %v208 = vld [vmem:[%s207] ss:$4 sm:$0xff]
        %211 = vrot.lane.b32.xlu0 %v206, 32
        %v212 = vpop.permute.xlu0 %211
        %213 = vrot.lane.b32.xlu0 %v208, 32
        %v214 = vpop.permute.xlu0 %213
        %vm217 = vcmask 523520
        %218 = vst.msk [vmem:[%s153] sm:$0xff] %vm217, %v212
        %219 = vst.msk [vmem:[%s153 + $0x8] sm:$0xff] %vm217, %v214
        %s220 = scalar_lea.vmem [#allocation2], 2
        %v221 = vld [vmem:[%s220] ss:$4 sm:$0xff]
        %s222 = scalar_lea.vmem [#allocation2], 34
        %v223 = vld [vmem:[%s222] ss:$4 sm:$0xff]
        %226 = vrot.lane.b32.xlu0 %v221, 64
        %v227 = vpop.permute.xlu0 %226
        %228 = vrot.lane.b32.xlu0 %v223, 64
        %v229 = vpop.permute.xlu0 %228
        %vm232 = vcmask 785920
        %233 = vst.msk [vmem:[%s153] sm:$0xff] %vm232, %v227
        %234 = vst.msk [vmem:[%s153 + $0x8] sm:$0xff] %vm232, %v229
        %s235 = scalar_lea.vmem [#allocation2], 3
        %v236 = vld [vmem:[%s235] ss:$4 sm:$0xff]
        %s237 = scalar_lea.vmem [#allocation2], 35
        %v238 = vld [vmem:[%s237] ss:$4 sm:$0xff]
        %241 = vrot.lane.b32.xlu0 %v236, 96
        %v242 = vpop.permute.xlu0 %241
        %243 = vrot.lane.b32.xlu0 %v238, 96
        %v244 = vpop.permute.xlu0 %243
        %vm247 = vcmask 1048320
        %248 = vst.msk [vmem:[%s153] sm:$0xff] %vm247, %v242
        %249 = vst.msk [vmem:[%s153 + $0x8] sm:$0xff] %vm247, %v244
        %s250 = sand.u32 %s68, 1
        %s251 = scalar_lea.sflag [#allocation5], %s250
        %s252 = sand.u32 %s68, 1
        %s253 = smul.addr %s252, 16
        %s254 = scalar_lea.vmem [#allocation6], %s253
        // Predicated region
        $region29: #{tpu_custom_call.1} parent=23 // pred_check
          %p255 = pneg %p78
        $region30: #{tpu_custom_call.1} parent=23 // pred_check_branch
          %257 = sbr.rel (%p255) target = $region32
        $region31: #{tpu_custom_call.1} parent=23 // pred_region
          %s258 = smul.u32 2, %s23
          %260 = vsyncadd %s251, 0
          %s261 = smul.addr %s22, 2
          %s262 = sadd.s32 %s258, %s261
          %s263 = smul.addr %s262, 8
          %s264 = scalar_lea.hbm %s1, %s263
          %s265 = sshll.u32 %s254, 4
          %s266 = int_to_ptr.vmem [resolvable:$true] %s265
          %s267 = sshll.u32 %s264, 4
          %s268 = int_to_ptr.hbm [resolvable:$true] %s267
          %273 = dma.vmem_to_hbm [thread:$0]  %s266, 256, %s268, %s251, 128, 128, 8
        $region32: #{tpu_custom_call.1} parent=23 // pred_fallthru
          _
      $region24: #{tpu_custom_call.1} parent=5 // pred_fallthru
        _
      %p274 = scmp.le.s32.totalorder 2, %s13
      // Predicated region
      $region33: #{tpu_custom_call.1} parent=5 // pred_check
        %p275 = pneg %p274
      $region34: #{tpu_custom_call.1} parent=5 // pred_check_branch
        %277 = sbr.rel (%p275) target = $region36
      $region35: #{tpu_custom_call.1} parent=5 // pred_region
        %s278 = ssub.s32 %s13, 2
        // Predicated region
        $region37: #{tpu_custom_call.1} parent=35 // pred_check
          %p279 = pneg %p84
        $region38: #{tpu_custom_call.1} parent=35 // pred_check_branch
          %281 = sbr.rel (%p279) target = $region40
        $region39: #{tpu_custom_call.1} parent=35 // pred_region
          %s282 = sand.u32 %s69, 1
          %s283 = scalar_lea.sflag [#allocation5], %s282
          %s284 = sand.u32 %s69, 1
          %s285 = smul.addr %s284, 16
          %s286 = scalar_lea.vmem [#allocation6], %s285
          %288 = dma.done %s283, 256
        $region40: #{tpu_custom_call.1} parent=35 // pred_fallthru
          _
      $region36: #{tpu_custom_call.1} parent=5 // pred_fallthru
        _
    $region6: #{tpu_custom_call.1} parent=1 // loop_footer
      %s17 = sadd.s32 1, %s13
    $region7: #{tpu_custom_call.1} parent=1 // loop_footer_branch
      %12 = sbr.rel target = $region3
    $region8: #{tpu_custom_call.1} parent=1 // loop_exit
      _
    %289 = vsyncpa [#allocation4], 1
    %s290 = scalar_lea.sflag [#allocation4], 1
    %291 = vsyncpa %s290, 1
    %292 = vsyncpa [#allocation5], 1
    %s293 = scalar_lea.sflag [#allocation5], 1
    %294 = vsyncpa %s293, 1

</llo_original>
